<compile_context>
chip_gen: v5e
topology: v5e:2x2
jax: 0.10.0
libtpu: 0.0.40
codegen_flags: <defaults>
</compile_context>

<pallas_src>
import jax
import jax.numpy as jnp
from jax.experimental import pallas as pl
from jax.experimental.pallas import tpu as pltpu

D_IN = 20            # linear in_features (feature axis of x)
D_HID = 10           # linear out_features / linear_1 in_features
PACK_W = D_IN + 1    # packed params: 20 lanes of g + 1 lane of h


def _model_kernel(pack_ref, x_ref, out_ref):
    """out[0, b] = (g . x[b, :] + h)^2 for every row of the batch tile.

    pack_ref : (1, 21)  VMEM, resident (constant index_map):
               lanes [0:20] = g (whole pre-square affine graph folded),
               lane  [20]   = h (folded scalar offset).
    x_ref    : (TB, 20) VMEM batch tile, batch on sublanes (no wrapper .T).
    out_ref  : (1, TB)  VMEM, lane-dense output (batch on lanes).
    """
    pack = pack_ref[...]
    g = pack[:, :D_IN]                      # (1, 20)
    h = pack[:, D_IN:]                      # (1, 1)
    x = x_ref[...]                          # (TB, 20)

    # Single contraction over the 20 features; RHS contracted on its last dim
    # (same 'bd' pattern as flash-attention logits) -> (1, TB), lane-dense.
    v9 = jnp.einsum("od,bd->ob", g, x,
                    preferred_element_type=jnp.float32) + h   # (1, TB)

    # TODO(synk): torch.mul(v9, v10, v10, v10) (v10 undefined) is read as a
    # square; the L2 norm over the length-1 trailing axis of v9^2 >= 0 is
    # exactly v9^2, so no sqrt / reduce is needed.
    out_ref[...] = v9 * v9


def model_forward(x1, w0, b0, w1, b1, conv_w, conv_b, *, max_tb=512):
    """x1: (B, 20, 1) (or (B, 20)) -> (B,) float32."""
    B = x1.shape[0]

    # permute(0,2,1) of (B, 20, 1) does not reorder elements; keep x as
    # (B, 20) -- no wrapper-side transpose (extra HBM pass) of the dominant
    # operand.
    x = x1.reshape(B, D_IN).astype(jnp.float32)                       # (B, 20)

    # ---- wrapper-time parameter folding (tiny, amortizable) -------------
    w0 = w0.astype(jnp.float32)                                       # (10, 20)
    b0v = b0.reshape(-1).astype(jnp.float32)                          # (10,)
    w1v = w1.reshape(-1).astype(jnp.float32)                          # (10,)
    b1s = b1.reshape(()).astype(jnp.float32)
    cw = conv_w.reshape(()).astype(jnp.float32)
    cb = conv_b.reshape(()).astype(jnp.float32)

    u = w1v @ w0                                                      # (20,) = W0^T w1
    s = jnp.sum(u)                                                    # w1 . rowsum(W0)
    wb = jnp.dot(w1v, b0v)                                            # w1 . b0
    c1 = cw * wb + cb * jnp.sum(w1v) + b1s                            # v5 offset
    g = (s * cw - 1.0) * u                                            # (20,)
    h = s * c1 + wb + b1s                                             # ()

    pack = jnp.concatenate([g, jnp.reshape(h, (1,))], axis=0)[None, :]  # (1, 21)

    # ---- batch tiling: lane-axis grid, 128-multiple tiles ---------------
    tb = min(max_tb, pl.cdiv(B, 128) * 128)       # 128..max_tb, multiple of 128
    n_tiles = pl.cdiv(B, tb)
    bp = n_tiles * tb
    if bp != B:
        # Remainder tile handled by zero padding (review item: pad or mask).
        x = jnp.pad(x, ((0, bp - B), (0, 0)))

    out = pl.pallas_call(
        _model_kernel,
        out_shape=jax.ShapeDtypeStruct((1, bp), jnp.float32),
        grid_spec=pltpu.PrefetchScalarGridSpec(
            num_scalar_prefetch=0,
            grid=(n_tiles,),
            in_specs=[
                pl.BlockSpec((1, PACK_W), lambda i: (0, 0)),   # resident params
                pl.BlockSpec((tb, D_IN), lambda i: (i, 0)),    # streamed batch tile
            ],
            out_specs=pl.BlockSpec((1, tb), lambda i: (0, i)), # lane-dense out
        ),
        compiler_params=pltpu.CompilerParams(
            dimension_semantics=("parallel",),                 # 2 TCs on v7x
            vmem_limit_bytes=32 * 1024 * 1024,
        ),
    )(pack, x)
    return out[0, :B]


if __name__ == "__main__":
    key = jax.random.PRNGKey(0)
    k_x, k_w0, k_b0, k_w1, k_b1, k_cw, k_cb, k_xb = jax.random.split(key, 8)

    # deterministic parameters (shapes per the intended module __init__)
    w0 = jax.random.normal(k_w0, (D_HID, D_IN), dtype=jnp.float32) * 0.1   # linear.weight
    b0 = jax.random.normal(k_b0, (D_HID,), dtype=jnp.float32) * 0.1        # linear.bias
    w1 = jax.random.normal(k_w1, (1, D_HID), dtype=jnp.float32) * 0.1      # linear_1.weight
    b1 = jax.random.normal(k_b1, (1,), dtype=jnp.float32) * 0.1            # linear_1.bias
    conv_w = jax.random.normal(k_cw, (1,), dtype=jnp.float32) * 0.1        # conv 1x1 weight
    conv_b = jax.random.normal(k_cb, (1,), dtype=jnp.float32) * 0.1        # conv bias

    def reference(x1):
        b = x1.shape[0]
        v1 = x1.reshape(b, D_IN)
        v2 = v1 @ w0.T + b0
        v4 = v2 * conv_w[0] + conv_b[0]
        v5 = v4 @ w1.T + b1
        v7 = v5 - v1
        v8 = v7 @ w0.T + b0
        v9 = v8 @ w1.T + b1
        v10 = v9 * v9
        return jnp.sqrt(jnp.sum(v10 * v10, axis=1))

    # Case 1: exactly the module's input shape (B = 1).
    x1 = jax.random.normal(k_x, (1, D_IN, 1), dtype=jnp.float32)
    out1 = model_forward(x1, w0, b0, w1, b1, conv_w, conv_b)
    jax.block_until_ready(out1)
    assert out1.shape == (1,), out1.shape
    assert jnp.allclose(out1, reference(x1), rtol=1e-4, atol=1e-5), (out1, reference(x1))

    # Case 2: larger batch exercising the parallel lane-axis grid + padding.
    xb = jax.random.normal(k_xb, (1000, D_IN, 1), dtype=jnp.float32)
    out2 = model_forward(xb, w0, b0, w1, b1, conv_w, conv_b)
    jax.block_until_ready(out2)
    assert out2.shape == (1000,), out2.shape
    assert jnp.allclose(out2, reference(xb), rtol=1e-4, atol=1e-5)

    print("KERNEL_OK")
</pallas_src>

<mosaic_0001>
module attributes {stable_mosaic.version = 11 : i64} {
  func.func @_model_kernel(%arg0: i32, %arg1: memref<1x21xf32, #tpu.memory_space<vmem>>, %arg2: memref<128x20xf32, #tpu.memory_space<vmem>>, %arg3: memref<1x128xf32, #tpu.memory_space<vmem>>) attributes {dimension_semantics = [#tpu.dimension_semantics<parallel>], iteration_bounds = array<i64: 1>, scalar_prefetch = 0 : i64, scratch_operands = 0 : i64, tpu.core_type = #tpu.core_type<tc>, window_params = [{pipeline_mode = #tpu.pipeline_mode<synchronous>, transform_indices = @transform_0, window_bounds = array<i64: 1, 21>}, {transform_indices = @transform_1, window_bounds = array<i64: 128, 20>}, {transform_indices = @transform_2, window_bounds = array<i64: 1, 128>}]} {
    %c0 = arith.constant 0 : index
    %c0_0 = arith.constant 0 : index
    %0 = vector.load %arg1[%c0, %c0_0] : memref<1x21xf32, #tpu.memory_space<vmem>>, vector<1x21xf32>
    %1 = vector.extract_strided_slice %0 {offsets = [0, 0], sizes = [1, 20], strides = [1, 1]} : vector<1x21xf32> to vector<1x20xf32>
    %2 = vector.extract_strided_slice %0 {offsets = [0, 20], sizes = [1, 1], strides = [1, 1]} : vector<1x21xf32> to vector<1x1xf32>
    %c0_1 = arith.constant 0 : index
    %c0_2 = arith.constant 0 : index
    %3 = vector.load %arg2[%c0_1, %c0_2] : memref<128x20xf32, #tpu.memory_space<vmem>>, vector<128x20xf32>
    "tpu.trace_start"() <{level = 10 : i32, message = "od,bd->ob"}> : () -> ()
    %cst = arith.constant dense<0.000000e+00> : vector<1x128xf32>
    %4 = tpu.matmul %1, %3, %cst {dimension_numbers = #tpu.dot_dimension_numbers<[1], [1], [0], [0], [0, 0, 1, 0], [], []>} : vector<1x20xf32>, vector<128x20xf32>, vector<1x128xf32> -> vector<1x128xf32>
    "tpu.trace_stop"() : () -> ()
    %5 = vector.broadcast %2 : vector<1x1xf32> to vector<1x128xf32>
    %6 = arith.addf %4, %5 : vector<1x128xf32>
    %7 = arith.mulf %6, %6 : vector<1x128xf32>
    %c0_3 = arith.constant 0 : index
    %c0_4 = arith.constant 0 : index
    %8 = vector.load %arg3[%c0_3, %c0_4] : memref<1x128xf32, #tpu.memory_space<vmem>>, vector<1x128xf32>
    tpu.vector_store %arg3[%c0_3, %c0_4], %7 {strides = array<i32>} : memref<1x128xf32, #tpu.memory_space<vmem>>, vector<1x128xf32>,
    return
  }
  func.func @transform_0(%arg0: i32) -> (i32, i32) {
    %c0_i32 = arith.constant 0 : i32
    %c0_i32_0 = arith.constant 0 : i32
    %c0_i32_1 = arith.constant 0 : i32
    return %c0_i32, %c0_i32_0 : i32, i32
  }
  func.func @transform_1(%arg0: i32) -> (i32, i32) {
    %c0_i32 = arith.constant 0 : i32
    %c0_i32_0 = arith.constant 0 : i32
    return %arg0, %c0_i32 : i32, i32
  }
  func.func @transform_2(%arg0: i32) -> (i32, i32) {
    %c0_i32 = arith.constant 0 : i32
    %c0_i32_0 = arith.constant 0 : i32
    return %c0_i32, %arg0 : i32, i32
  }
}

</mosaic_0001>

<llo_original>
// kernel: tpu_custom_call.1
$region0: #{tpu_custom_call.1}
  #allocation0 [shape = 'u32[]', space=smem, size = 0x4, offset = 0x4, fixed_abs, tag = 'smem constant byte address 0x4 - core index']
  #allocation1 [shape = 'u32[72,128]{1,0:T(1,128)}', space=vmem, size = 0x9000, scoped, tag = 'internal scratch']
  %s0 = inlined_call_operand.vmem [shape: f32[1,21], index: 0, kind: input, shape index: {}]
  %s1 = inlined_call_operand.vmem [shape: f32[128,20], index: 1, kind: input, shape index: {}]
  %s2 = inlined_call_operand.hbm [shape: f32[1,128], index: 2, kind: output, shape index: {}]
  %s3 = sld [smem:[#allocation0]]
  $region18: #{tpu_custom_call.1} parent=0
    _
  %s5 = ssub.s32 1, %s3
  %s6 = scalar_select 0, %s5, %s3
  $region1: #{tpu_custom_call.1} parent=0
    #allocation2 [shape = 'u8[512]{0}', space=vmem, size = 0x400, scoped, tag = 'output window, operand 0, single buffered']
    #allocation3 [shape = 's32[1]{0}', space=sflag, size = 0x4, scoped, tag = 'scoped memory for tpu_custom_call.1']
    %7 = vsyncpa [#allocation3], 0
    // Predicated region
    $region2: #{tpu_custom_call.1} parent=1 // pred_check
      _
    $region3: #{tpu_custom_call.1} parent=1 // pred_check_branch
      %9 = sbr.rel (0) target = $region5
    $region4: #{tpu_custom_call.1} parent=1 // pred_region
      _
    $region5: #{tpu_custom_call.1} parent=1 // pred_fallthru
      _
    // Predicated region
    $region6: #{tpu_custom_call.1} parent=1 // pred_check
      _
    $region7: #{tpu_custom_call.1} parent=1 // pred_check_branch
      %11 = sbr.rel (0) target = $region9
    $region8: #{tpu_custom_call.1} parent=1 // pred_region
      _
    $region9: #{tpu_custom_call.1} parent=1 // pred_fallthru
      _
    %v12 = vld [vmem:[%s0] sm:$0x1]
    %v13 = vld [vmem:[%s1] sm:$0xff]
    %v14 = vld [vmem:[%s1 + $0x8] sm:$0xff]
    %v15 = vld [vmem:[%s1 + $0x10] sm:$0xff]
    %v16 = vld [vmem:[%s1 + $0x18] sm:$0xff]
    %v17 = vld [vmem:[%s1 + $0x20] sm:$0xff]
    %v18 = vld [vmem:[%s1 + $0x28] sm:$0xff]
    %v19 = vld [vmem:[%s1 + $0x30] sm:$0xff]
    %v20 = vld [vmem:[%s1 + $0x38] sm:$0xff]
    %v21 = vld [vmem:[%s1 + $0x40] sm:$0xff]
    %v22 = vld [vmem:[%s1 + $0x48] sm:$0xff]
    %v23 = vld [vmem:[%s1 + $0x50] sm:$0xff]
    %v24 = vld [vmem:[%s1 + $0x58] sm:$0xff]
    %v25 = vld [vmem:[%s1 + $0x60] sm:$0xff]
    %v26 = vld [vmem:[%s1 + $0x68] sm:$0xff]
    %v27 = vld [vmem:[%s1 + $0x70] sm:$0xff]
    %v28 = vld [vmem:[%s1 + $0x78] sm:$0xff]
    %30 = vset.pattern.permute.xlu0 20
    %31 = vperm.xlu0 %30, %v12
    %v32 = vpop.permute.xlu0 %31
    %v34 = vperm.slane %v32, 0
    %vm35 = vcmask 162816
    %v36 = vsel %vm35, %v12, 0
    %v39 = vsel %vm35, %v13, 0
    %v42 = vsel %vm35, %v14, 0
    %v45 = vsel %vm35, %v15, 0
    %v48 = vsel %vm35, %v16, 0
    %v51 = vsel %vm35, %v17, 0
    %v54 = vsel %vm35, %v18, 0
    %v57 = vsel %vm35, %v19, 0
    %v60 = vsel %vm35, %v20, 0
    %v63 = vsel %vm35, %v21, 0
    %v66 = vsel %vm35, %v22, 0
    %v69 = vsel %vm35, %v23, 0
    %v72 = vsel %vm35, %v24, 0
    %v75 = vsel %vm35, %v25, 0
    %v78 = vsel %vm35, %v26, 0
    %v81 = vsel %vm35, %v27, 0
    %v84 = vsel %vm35, %v28, 0
    %86 = vmatpush.xpose.msra.mxu0 %v84
    %87 = vmatpush.xpose.msra.mxu0 %v81
    %88 = vmatpush.xpose.msra.mxu0 %v78
    %89 = vmatpush.xpose.msra.mxu0 %v75
    %90 = vmatpush.xpose.msra.mxu0 %v72
    %91 = vmatpush.xpose.msra.mxu0 %v69
    %92 = vmatpush.xpose.msra.mxu0 %v66
    %93 = vmatpush.xpose.msra.mxu0 %v63
    %94 = vmatpush.xpose.msra.mxu0 %v60
    %95 = vmatpush.xpose.msra.mxu0 %v57
    %96 = vmatpush.xpose.msra.mxu0 %v54
    %97 = vmatpush.xpose.msra.mxu0 %v51
    %98 = vmatpush.xpose.msra.mxu0 %v48
    %99 = vmatpush.xpose.msra.mxu0 %v45
    %100 = vmatpush.xpose.msra.mxu0 %v42
    %101 = vmatpush.xpose.msra.mxu0 %v39
    %102 = vmatmul.f32.gmra.mxu0 %v36
    %v103 = vpop.f32.mrf.mxu0
    %v104 = vadd.f32 %v34, %v103
    %105 = vdwg.mxu0
    %v106 = vmul.f32 %v104, %v104
    %107 = vst [vmem:[#allocation2] sm:$0x1] %v106
    // Predicated region
    $region10: #{tpu_custom_call.1} parent=1 // pred_check
      _
    $region11: #{tpu_custom_call.1} parent=1 // pred_check_branch
      %109 = sbr.rel (0) target = $region13
    $region12: #{tpu_custom_call.1} parent=1 // pred_region
      %111 = vsyncadd [#allocation3], 0
      %s113 = sshll.u32 [#allocation2], 4
      %s114 = int_to_ptr.vmem [resolvable:$true] %s113
      %s115 = sshll.u32 %s2, 4
      %s116 = int_to_ptr.hbm [resolvable:$true] %s115
      %118 = dma.vmem_to_hbm [thread:$0]  %s114, 16, %s116, [#allocation3]
    $region13: #{tpu_custom_call.1} parent=1 // pred_fallthru
      _
    // Predicated region
    $region14: #{tpu_custom_call.1} parent=1 // pred_check
      _
    $region15: #{tpu_custom_call.1} parent=1 // pred_check_branch
      %120 = sbr.rel (0) target = $region17
    $region16: #{tpu_custom_call.1} parent=1 // pred_region
      %122 = dma.done [#allocation3], 16
    $region17: #{tpu_custom_call.1} parent=1 // pred_fallthru
      _
    %123 = vsyncpa [#allocation3], 1

</llo_original>
